<compile_context>
chip_gen: v5e
topology: v5e:2x2
jax: 0.10.0
libtpu: 0.0.40
codegen_flags: <defaults>
</compile_context>

<pallas_src>
import functools

import numpy as np
import jax
import jax.numpy as jnp
from jax.experimental import pallas as pl
from jax.experimental.pallas import tpu as pltpu

_BN_EPS = 1e-5
_VMEM_LIMIT = 32 * 1024 * 1024


def _round_up(x, m):
    return (x + m - 1) // m * m


def _cdiv(a, b):
    return -(-a // b)


def _cparams(*sem):
    return pltpu.CompilerParams(dimension_semantics=sem,
                                vmem_limit_bytes=_VMEM_LIMIT)


# --------------------------------------------------------------------------
# Pallas kernels
# --------------------------------------------------------------------------

def _gemm_kernel(a_ref, b_ref, bias_ref, *rest, act, with_stats):
    """Tiled GEMM, bf16 operands, f32 accumulator, bias (+act) epilogue.

    Optionally emits per-output-column sum / sum-of-squares over the row
    tile (fused BatchNorm statistics).  The sums are taken directly from the
    accumulator with the bias folded in analytically, so the epilogue never
    materializes an extra full f32 tile.  Grid: (M, N, K), K innermost.
    """
    if with_stats:
        o_ref, sum_ref, sq_ref, acc_ref = rest
    else:
        o_ref, acc_ref = rest

    @pl.when(pl.program_id(2) == 0)
    def _():
        acc_ref[...] = jnp.zeros_like(acc_ref)

    acc_ref[...] += jnp.dot(a_ref[...], b_ref[...],
                            preferred_element_type=jnp.float32)

    @pl.when(pl.program_id(2) == pl.num_programs(2) - 1)
    def _():
        bias = bias_ref[...]
        y = acc_ref[...] + bias
        if act == "relu":
            y = jnp.maximum(y, 0.0)
        elif act == "tanh":
            y = jnp.tanh(y)
        o_ref[...] = y.astype(o_ref.dtype)
        if with_stats:
            # act is None on this path: sum(y) = sum(acc) + rows*b,
            # sum(y^2) = sum(acc^2) + 2*b*sum(acc) + rows*b^2.
            rows = float(acc_ref.shape[0])
            acc = acc_ref[...]
            s = jnp.sum(acc, axis=0, keepdims=True)
            q = jnp.sum(acc * acc, axis=0, keepdims=True)
            sum_ref[...] = jnp.broadcast_to(s + rows * bias, sum_ref.shape)
            sq_ref[...] = jnp.broadcast_to(
                q + 2.0 * bias * s + rows * bias * bias, sq_ref.shape)


def _affine_act_kernel(x_ref, s_ref, b_ref, o_ref, *, act):
    y = x_ref[...].astype(jnp.float32) * s_ref[...] + b_ref[...]
    if act == "relu":
        y = jnp.maximum(y, 0.0)
    elif act == "tanh":
        y = jnp.tanh(y)
    o_ref[...] = y.astype(o_ref.dtype)


def _affine2_relu_kernel(x1_ref, x2_ref, s1_ref, b1_ref, s2_ref, b2_ref, o_ref):
    y = (x1_ref[...].astype(jnp.float32) * s1_ref[...] + b1_ref[...]
         + x2_ref[...].astype(jnp.float32) * s2_ref[...] + b2_ref[...])
    o_ref[...] = jnp.maximum(y, 0.0).astype(o_ref.dtype)


# --------------------------------------------------------------------------
# GEMM wrapper (bf16 operands, f32 accumulate, optional fused BN statistics)
# --------------------------------------------------------------------------

def _pick_tk(k):
    if k <= 1024:
        return k                      # single K step, no K padding
    k128 = _round_up(k, 128)
    for cand in (512, 256, 128):
        if k128 % cand == 0:
            return cand
    return 128


def _pick_tm(m, cap=256):
    m16 = _round_up(m, 16)
    if m16 <= cap:
        return m16
    for tm in range(cap, 15, -16):    # prefer a tile that divides M (no pad copy)
        if m % tm == 0:
            return tm
    return cap


def conv_gemm(a, b, bias, *, act=None, with_stats=False,
              out_dtype=jnp.bfloat16):
    """a: (M,K), b: (K,N), bias: (N,) -> (M,N) [+ per-column sum/sumsq]."""
    assert not (with_stats and act is not None), "fused stats require act=None"
    m, k = a.shape
    _, n = b.shape

    tk = _pick_tk(k)
    kp = _round_up(k, tk)
    if n % 128 == 0:
        tn = 256 if n % 256 == 0 else 128
    else:
        # TODO(synk): lane-sparse N (<128): emit the GEMM transposed so pixels
        #             sit on the 128-lane axis (final tanh layer, tiny couts).
        tn = n
    tm = _pick_tm(m)
    mp = _round_up(m, tm)

    a = a.astype(jnp.bfloat16)
    b = b.astype(jnp.bfloat16)
    bias = bias.astype(jnp.float32)
    if (mp, kp) != (m, k):
        # TODO(synk): avoid this pad copy via in-kernel row masking.
        a = jnp.pad(a, ((0, mp - m), (0, kp - k)))
    if kp != k:
        b = jnp.pad(b, ((0, kp - k), (0, 0)))
    bias2 = bias.reshape(1, n)

    gm, gn, gk = mp // tm, n // tn, kp // tk

    out_shapes = [jax.ShapeDtypeStruct((mp, n), out_dtype)]
    out_specs = [pl.BlockSpec((tm, tn), lambda i, j, kk: (i, j))]
    if with_stats:
        stat_shape = jax.ShapeDtypeStruct((8 * gm, n), jnp.float32)
        stat_spec = pl.BlockSpec((8, tn), lambda i, j, kk: (i, j))
        out_shapes += [stat_shape, stat_shape]
        out_specs += [stat_spec, stat_spec]

    res = pl.pallas_call(
        functools.partial(_gemm_kernel, act=act, with_stats=with_stats),
        out_shape=tuple(out_shapes),
        grid_spec=pltpu.PrefetchScalarGridSpec(
            num_scalar_prefetch=0,
            grid=(gm, gn, gk),
            in_specs=[
                pl.BlockSpec((tm, tk), lambda i, j, kk: (i, kk)),
                pl.BlockSpec((tk, tn), lambda i, j, kk: (kk, j)),
                pl.BlockSpec((1, tn), lambda i, j, kk: (0, j)),
            ],
            out_specs=tuple(out_specs),
            scratch_shapes=[pltpu.VMEM((tm, tn), jnp.float32)],
        ),
        compiler_params=_cparams("parallel", "parallel", "arbitrary"),
    )(a, b, bias2)

    out = res[0][:m]
    if not with_stats:
        return out
    # Padded (zero) A rows contribute exactly `bias` per column; remove them.
    pad_rows = mp - m
    s = res[1][::8].sum(axis=0) - pad_rows * bias
    q = res[2][::8].sum(axis=0) - pad_rows * bias * bias
    return out, s, q


# --------------------------------------------------------------------------
# Lane-dense elementwise wrappers (folded BatchNorm affine / residual add)
# --------------------------------------------------------------------------

def _lane_pack(x_flat, target_bytes=512 * 1024):
    """(M, C) -> (rows, width) lane-dense layout (+ repeat, tile rows, padded M).

    For C < 128 (C must divide 128) several pixels are packed per 128-lane
    row so VPU loads/stores are unmasked.  Tile rows are capped so one
    buffer stays under `target_bytes` (safe on v5e/v7x VMEM budgets).
    """
    m, c = x_flat.shape
    if c % 128 == 0:
        width, rep = c, 1
        rows_needed = m
    else:
        assert 128 % c == 0, c
        rep = 128 // c
        width = 128
        rows_needed = _cdiv(m, rep)
    cap = (target_bytes // (width * x_flat.dtype.itemsize)) // 16 * 16
    cap = max(16, min(1024, cap))
    tile_rows = min(cap, _round_up(rows_needed, 16))
    rows = _round_up(rows_needed, tile_rows)
    mp = rows * rep
    if mp != m:
        x_flat = jnp.pad(x_flat, ((0, mp - m), (0, 0)))
    return x_flat.reshape(rows, width), rep, tile_rows, mp


def affine_act(x_flat, scale, shift, *, act=None, out_dtype=jnp.bfloat16):
    """y = act(x * scale + shift), per-channel scale/shift (folded BatchNorm)."""
    m, c = x_flat.shape
    xp, rep, tile_rows, mp = _lane_pack(x_flat)
    rows, width = xp.shape
    s = jnp.tile(scale.astype(jnp.float32), rep).reshape(1, width)
    b = jnp.tile(shift.astype(jnp.float32), rep).reshape(1, width)
    out = pl.pallas_call(
        functools.partial(_affine_act_kernel, act=act),
        out_shape=jax.ShapeDtypeStruct((rows, width), out_dtype),
        grid_spec=pltpu.PrefetchScalarGridSpec(
            num_scalar_prefetch=0,
            grid=(rows // tile_rows,),
            in_specs=[pl.BlockSpec((tile_rows, width), lambda i: (i, 0)),
                      pl.BlockSpec((1, width), lambda i: (0, 0)),
                      pl.BlockSpec((1, width), lambda i: (0, 0))],
            out_specs=pl.BlockSpec((tile_rows, width), lambda i: (i, 0)),
        ),
        compiler_params=_cparams("parallel"),
    )(xp, s, b)
    return out.reshape(mp, c)[:m]


def affine2_relu(x1, s1, b1, x2, s2, b2, *, out_dtype=jnp.bfloat16):
    """y = relu(BN(x1) + BN(x2)) with both BNs folded to scale/shift."""
    m, c = x1.shape
    x1p, rep, tile_rows, mp = _lane_pack(x1)
    x2p, rep2, tile_rows2, mp2 = _lane_pack(x2)
    assert (rep, tile_rows, mp) == (rep2, tile_rows2, mp2)
    rows, width = x1p.shape

    def vec(v):
        return jnp.tile(v.astype(jnp.float32), rep).reshape(1, width)

    row_spec = pl.BlockSpec((tile_rows, width), lambda i: (i, 0))
    vec_spec = pl.BlockSpec((1, width), lambda i: (0, 0))
    out = pl.pallas_call(
        _affine2_relu_kernel,
        out_shape=jax.ShapeDtypeStruct((rows, width), out_dtype),
        grid_spec=pltpu.PrefetchScalarGridSpec(
            num_scalar_prefetch=0,
            grid=(rows // tile_rows,),
            in_specs=[row_spec, row_spec, vec_spec, vec_spec, vec_spec, vec_spec],
            out_specs=row_spec,
        ),
        compiler_params=_cparams("parallel"),
    )(x1p, x2p, vec(s1), vec(b1), vec(s2), vec(b2))
    return out.reshape(mp, c)[:m]


# --------------------------------------------------------------------------
# Plain-JAX glue: im2col, polyphase ConvTranspose, 3x3 conv, BN folding
# --------------------------------------------------------------------------

def _im2col(x_pad, k):
    # TODO(synk): fuse the k*k tap gather into the GEMM K grid to avoid
    #             materializing the expanded matrix in HBM (biggest remaining
    #             HBM consumer for the 3x3 convs).
    n, hp, wp, c = x_pad.shape
    ho, wo = hp - k + 1, wp - k + 1
    cols = jnp.concatenate(
        [x_pad[:, a:a + ho, b:b + wo, :] for a in range(k) for b in range(k)],
        axis=-1)
    return cols.reshape(n * ho * wo, k * k * c), ho, wo


def conv3x3(x, w, bias, *, with_stats=False):
    """x: (N,H,W,Cin) bf16/f32; w: (Cout,Cin,3,3) PyTorch layout; stride 1, pad 1."""
    n, h, wd, cin = x.shape
    cout = w.shape[0]
    xp = jnp.pad(x.astype(jnp.bfloat16), ((0, 0), (1, 1), (1, 1), (0, 0)))
    cols, ho, wo = _im2col(xp, 3)
    w_mat = jnp.transpose(w, (2, 3, 1, 0)).reshape(9 * cin, cout)
    res = conv_gemm(cols, w_mat, bias, with_stats=with_stats)
    if with_stats:
        out, s, q = res
        return out.reshape(n, ho, wo, cout), s, q
    return res.reshape(n, ho, wo, cout)


def convt4x4_s2(x, branches, *, output_padding, act=None, with_stats=False,
                out_dtype=jnp.bfloat16):
    """Fused multi-branch ConvTranspose2d(k=4, stride=2, padding=1).

    branches: list of (w, bias) with w in PyTorch (Cin, Cout, 4, 4) layout.
    All four output-pixel parities share ONE 2x2 im2col of the (un-dilated)
    input; every branch's phase weights are packed side by side along N so
    main + shortcut run in a single lane-dense GEMM.  The spatial outputs are
    produced with a pixel-shuffle de-interleave (transpose/reshape + one
    contiguous crop) instead of strided scatters.  With with_stats, BatchNorm
    sum/sumsq are taken from the GEMM epilogue and corrected for the phantom
    first window-row/col of the raw-even parities via tiny strip reductions.
    """
    assert not (with_stats and output_padding != 1)
    n, h, wd, cin = x.shape
    nb = len(branches)
    cout = branches[0][0].shape[1]
    op = output_padding
    hw, ww = h + 1, wd + 1
    oh, ow = 2 * h + op, 2 * wd + op

    xp = jnp.pad(x.astype(jnp.bfloat16), ((0, 0), (1, 1), (1, 1), (0, 0)))
    cols, _, _ = _im2col(xp, 2)                       # (n*hw*ww, 4*cin)

    taps = ((2, 0), (3, 1))                           # kernel taps per parity
    w_cols, b_cols = [], []
    for w, b in branches:
        wk = jnp.transpose(w, (2, 3, 0, 1))           # (kh, kw, cin, cout)
        for a in (0, 1):
            for bb in (0, 1):
                sub = wk[jnp.array(taps[a])][:, jnp.array(taps[bb])]
                w_cols.append(sub.reshape(4 * cin, cout))
        b_cols.append(jnp.tile(b, 4))
    w_ph = jnp.concatenate(w_cols, axis=1)            # (4*cin, nb*4*cout)
    bias_ph = jnp.concatenate(b_cols, axis=0)

    res = conv_gemm(cols, w_ph, bias_ph, act=act, with_stats=with_stats,
                    out_dtype=out_dtype)
    y = res[0] if with_stats else res
    y6 = y.reshape(n, hw, ww, nb, 2, 2, cout)         # (n, m, j, branch, a, b, c)

    # Pixel-shuffle: raw[2m+a, 2j+b] = phase(a,b)[m, j]; output = raw cropped
    # by one row/col at the top/left (plus bottom/right when op == 0).
    raw = jnp.transpose(y6, (3, 0, 1, 4, 2, 5, 6)).reshape(
        nb, n, 2 * hw, 2 * ww, cout)
    sp = raw[:, :, 1:1 + oh, 1:1 + ow, :]
    outs = [sp[i] for i in range(nb)]
    if not with_stats:
        return outs

    s_full = res[1].reshape(nb, 2, 2, cout)
    q_full = res[2].reshape(nb, 2, 2, cout)
    row0 = y6[:, 0].astype(jnp.float32)               # (n, ww, nb, 2, 2, c)
    col0 = y6[:, :, 0].astype(jnp.float32)            # (n, hw, nb, 2, 2, c)
    crn = y6[:, 0, 0].astype(jnp.float32)             # (n, nb, 2, 2, c)

    def _valid(full, r0, c0, cr):
        fix = jnp.zeros_like(full)
        fix = fix.at[:, 0, :, :].add(r0[:, 0])        # phantom m=0 rows (a==0)
        fix = fix.at[:, :, 0, :].add(c0[:, :, 0])     # phantom j=0 cols (b==0)
        fix = fix.at[:, 0, 0, :].add(-cr[:, 0, 0])    # double-counted corner
        return (full - fix).sum(axis=(1, 2))          # (nb, cout)

    s_v = _valid(s_full, row0.sum(axis=(0, 1)), col0.sum(axis=(0, 1)),
                 crn.sum(axis=0))
    q_v = _valid(q_full, (row0 * row0).sum(axis=(0, 1)),
                 (col0 * col0).sum(axis=(0, 1)), (crn * crn).sum(axis=0))
    stats = [(s_v[i], q_v[i]) for i in range(nb)]
    return outs, stats


def convt_stem(x, w, bias):
    """ConvTranspose2d(cin, cout, 4, stride=1, padding=0) on a 1x1 input.

    Returns the (N,4,4,Cout) bf16 activation plus fused per-channel sum/sumsq.
    """
    n, h, wd, cin = x.shape
    assert h == 1 and wd == 1
    cout = w.shape[1]
    w_mat = jnp.transpose(w, (0, 2, 3, 1)).reshape(cin, 16 * cout)
    bias16 = jnp.tile(bias, 16)
    out, s, q = conv_gemm(x.reshape(n, cin), w_mat, bias16, with_stats=True)
    out = out.reshape(n, 4, 4, cout)
    s = s.reshape(16, cout).sum(axis=0)
    q = q.reshape(16, cout).sum(axis=0)
    return out, s, q


def _bn_fold(s, q, count, gamma, beta):
    """Training-mode BatchNorm folded to per-channel (scale, shift)."""
    mean = s / count
    var = jnp.maximum(q / count - mean * mean, 0.0)   # biased variance
    scale = gamma * jax.lax.rsqrt(var + _BN_EPS)
    shift = beta - mean * scale
    return scale, shift


# --------------------------------------------------------------------------
# Generator model
# --------------------------------------------------------------------------

FULL_CONFIG = dict(
    latent=100, stem_out=1024,
    blocks=[(1024, 512), (512, 256), (256, 128), (128, 64),
            (64, 32), (32, 16), (16, 8)])

# Reduced-depth/width configuration with identical structure, used for the
# sandbox smoke test (the full model upsamples 1x1 -> 1278x1278, far beyond
# the smoke-test time budget).  Swap in FULL_CONFIG for the exact original.
TEST_CONFIG = dict(
    latent=100, stem_out=256,
    blocks=[(256, 128), (128, 64), (64, 32)])


def residual_block_up(x, p):
    n = x.shape[0]
    cout = p["dw"].shape[1]
    # main ConvT + shortcut ConvT fused in one polyphase GEMM (+ BN stats)
    outs, stats = convt4x4_s2(
        x, [(p["dw"], p["db"]), (p["sw"], p["sb"])],
        output_padding=1, with_stats=True)
    main_sp, short_sp = outs
    (sm, qm), (ss, qs) = stats
    _, oh, ow, _ = main_sp.shape
    count = n * oh * ow
    # main: BN -> ReLU -> Conv3x3 -> BN (stats fused into the conv GEMM)
    sc1, sh1 = _bn_fold(sm, qm, count, p["g1"], p["b1"])
    a = affine_act(main_sp.reshape(count, cout), sc1, sh1, act="relu")
    h2, s2, q2 = conv3x3(a.reshape(n, oh, ow, cout), p["cw"], p["cb"],
                         with_stats=True)
    sc2, sh2 = _bn_fold(s2, q2, count, p["g2"], p["b2"])
    # shortcut BN is folded to scale/shift and fused into the final add+ReLU
    scs, shs = _bn_fold(ss, qs, count, p["gs"], p["bs"])
    out = affine2_relu(h2.reshape(count, cout), sc2, sh2,
                       short_sp.reshape(count, cout), scs, shs)
    return out.reshape(n, oh, ow, cout)


def generator_forward(params, x_nchw):
    x = jnp.transpose(x_nchw, (0, 2, 3, 1)).astype(jnp.float32)  # NCHW -> NHWC
    n = x.shape[0]
    # stem: ConvTranspose2d(latent, c0, 4, 1, 0) -> BN -> ReLU
    h, s0, q0 = convt_stem(x, params["w0"], params["b0"])
    c0 = h.shape[-1]
    sc0, sh0 = _bn_fold(s0, q0, n * 16, params["g0"], params["be0"])
    hf = affine_act(h.reshape(-1, c0), sc0, sh0, act="relu")
    h = hf.reshape(n, 4, 4, c0)
    # ResidualBlockUp stages
    for blk in params["blocks"]:
        h = residual_block_up(h, blk)
    # final: ConvTranspose2d(c_last, 1, 4, 2, 1) -> Tanh (tanh fused in GEMM)
    (out,) = convt4x4_s2(h, [(params["wf"], params["bf"])],
                         output_padding=0, act="tanh", out_dtype=jnp.float32)
    return jnp.transpose(out, (0, 3, 1, 2))                      # NHWC -> NCHW


def init_params(key, config):
    blocks = config["blocks"]
    latent, stem_out = config["latent"], config["stem_out"]
    keys = iter(jax.random.split(key, 16 * (len(blocks) + 2)))

    def nxt():
        return next(keys)

    def conv_w(shape, fan_in):
        return jax.random.normal(nxt(), shape, jnp.float32) / np.sqrt(float(fan_in))

    def bias(nc):
        return 0.01 * jax.random.normal(nxt(), (nc,), jnp.float32)

    def gamma(nc):
        return 1.0 + 0.1 * jax.random.normal(nxt(), (nc,), jnp.float32)

    def beta(nc):
        return 0.1 * jax.random.normal(nxt(), (nc,), jnp.float32)

    params = {
        "w0": conv_w((latent, stem_out, 4, 4), latent * 16), "b0": bias(stem_out),
        "g0": gamma(stem_out), "be0": beta(stem_out),
        "blocks": [],
        "wf": conv_w((blocks[-1][1], 1, 4, 4), blocks[-1][1] * 16), "bf": bias(1),
    }
    for cin, cout in blocks:
        params["blocks"].append({
            "dw": conv_w((cin, cout, 4, 4), cin * 16), "db": bias(cout),
            "g1": gamma(cout), "b1": beta(cout),
            "cw": conv_w((cout, cout, 3, 3), cout * 9), "cb": bias(cout),
            "g2": gamma(cout), "b2": beta(cout),
            "sw": conv_w((cin, cout, 4, 4), cin * 16), "sb": bias(cout),
            "gs": gamma(cout), "bs": beta(cout),
        })
    return params


# --------------------------------------------------------------------------
# Reference ConvTranspose2d (for numerical validation of the polyphase path)
# --------------------------------------------------------------------------

def _convt_ref(x_nhwc, w, b, stride, padding, output_padding):
    cin, cout, kh, kw = w.shape
    wk = jnp.transpose(w[:, :, ::-1, ::-1], (2, 3, 0, 1))  # flipped, HWIO
    pad = ((kh - 1 - padding, kh - 1 - padding + output_padding),
           (kw - 1 - padding, kw - 1 - padding + output_padding))
    y = jax.lax.conv_general_dilated(
        x_nhwc, wk, window_strides=(1, 1), padding=pad,
        lhs_dilation=(stride, stride),
        dimension_numbers=("NHWC", "HWIO", "NHWC"))
    return y + b


if __name__ == "__main__":
    key = jax.random.PRNGKey(0)
    pkey, xkey, vkey = jax.random.split(key, 3)

    # --- numerical validation of the polyphase ConvTranspose lowering ------
    k1, k2, k3 = jax.random.split(vkey, 3)
    xv = jax.random.normal(k1, (2, 5, 5, 16), jnp.float32)
    wv = jax.random.normal(k2, (16, 8, 4, 4), jnp.float32) / 8.0
    bv = 0.1 * jax.random.normal(k3, (8,), jnp.float32)

    val = jax.jit(lambda a, b, c: convt4x4_s2(
        a, [(b, c)], output_padding=1, with_stats=True))
    (got,), ((_, qg),) = jax.block_until_ready(val(xv, wv, bv))
    ref = jax.jit(lambda a, b, c: _convt_ref(a, b, c, 2, 1, 1))(xv, wv, bv)
    gf = np.asarray(got, np.float32)
    np.testing.assert_allclose(gf, np.asarray(ref), atol=5e-2, rtol=5e-2)
    np.testing.assert_allclose(np.asarray(qg), (gf * gf).sum(axis=(0, 1, 2)),
                               rtol=5e-2)

    # --- end-to-end generator smoke test ------------------------------------
    cfg = TEST_CONFIG
    params = init_params(pkey, cfg)
    # Latent input, PyTorch NCHW convention: (batch=2, latent, 1, 1)
    x = jax.random.normal(xkey, (2, cfg["latent"], 1, 1), jnp.float32)

    fwd = jax.jit(generator_forward)
    out = jax.block_until_ready(fwd(params, x))

    side = 4
    for _ in cfg["blocks"]:
        side = 2 * side + 1          # ConvT(4, s=2, p=1, op=1)
    side = 2 * side                  # final ConvT(4, s=2, p=1, op=0)
    assert out.shape == (2, 1, side, side), out.shape
    assert bool(jnp.all(jnp.isfinite(out)))
    assert bool(jnp.all(jnp.abs(out) <= 1.0 + 1e-6))
    print("KERNEL_OK")
</pallas_src>

<mosaic_0001>
module attributes {stable_mosaic.version = 11 : i64} {
  func.func @_gemm_kernel(%arg0: i32, %arg1: i32, %arg2: i32, %arg3: memref<80x64xbf16, #tpu.memory_space<vmem>>, %arg4: memref<64x32xbf16, #tpu.memory_space<vmem>>, %arg5: memref<1x32xf32, #tpu.memory_space<vmem>>, %arg6: memref<80x32xbf16, #tpu.memory_space<vmem>>, %arg7: memref<8x32xf32, #tpu.memory_space<vmem>>, %arg8: memref<8x32xf32, #tpu.memory_space<vmem>>, %arg9: memref<80x32xf32, #tpu.memory_space<vmem>>) attributes {dimension_semantics = [#tpu.dimension_semantics<parallel>, #tpu.dimension_semantics<parallel>, #tpu.dimension_semantics<arbitrary>], iteration_bounds = array<i64: 1, 1, 1>, scalar_prefetch = 0 : i64, scratch_operands = 1 : i64, tpu.core_type = #tpu.core_type<tc>, window_params = [{transform_indices = @transform_0, window_bounds = array<i64: 80, 64>}, {transform_indices = @transform_1, window_bounds = array<i64: 64, 32>}, {transform_indices = @transform_2, window_bounds = array<i64: 1, 32>}, {transform_indices = @transform_3, window_bounds = array<i64: 80, 32>}, {transform_indices = @transform_4, window_bounds = array<i64: 8, 32>}, {transform_indices = @transform_5, window_bounds = array<i64: 8, 32>}]} {
    %c0_i32 = arith.constant 0 : i32
    %0 = arith.cmpi eq, %arg2, %c0_i32 : i32
    %1 = arith.extui %0 : i1 to i32
    %c0_i32_0 = arith.constant 0 : i32
    %2 = arith.cmpi ne, %1, %c0_i32_0 : i32
    scf.if %2 {
      %cst_10 = arith.constant 0.000000e+00 : f32
      %12 = vector.broadcast %cst_10 : f32 to vector<80x32xf32>
      %c0_11 = arith.constant 0 : index
      %c0_12 = arith.constant 0 : index
      %13 = vector.load %arg9[%c0_11, %c0_12] : memref<80x32xf32, #tpu.memory_space<vmem>>, vector<80x32xf32>
      tpu.vector_store %arg9[%c0_11, %c0_12], %12 {strides = array<i32>} : memref<80x32xf32, #tpu.memory_space<vmem>>, vector<80x32xf32>,
    } else {
    }
    %c0 = arith.constant 0 : index
    %c0_1 = arith.constant 0 : index
    %3 = vector.load %arg9[%c0, %c0_1] : memref<80x32xf32, #tpu.memory_space<vmem>>, vector<80x32xf32>
    %c0_2 = arith.constant 0 : index
    %c0_3 = arith.constant 0 : index
    %4 = vector.load %arg3[%c0_2, %c0_3] : memref<80x64xbf16, #tpu.memory_space<vmem>>, vector<80x64xbf16>
    %c0_4 = arith.constant 0 : index
    %c0_5 = arith.constant 0 : index
    %5 = vector.load %arg4[%c0_4, %c0_5] : memref<64x32xbf16, #tpu.memory_space<vmem>>, vector<64x32xbf16>
    %cst = arith.constant dense<0.000000e+00> : vector<80x32xf32>
    %6 = tpu.matmul %4, %5, %cst {dimension_numbers = #tpu.dot_dimension_numbers<[1], [0], [0], [1], [0, 0, 1, 1], [], []>} : vector<80x64xbf16>, vector<64x32xbf16>, vector<80x32xf32> -> vector<80x32xf32>
    %7 = arith.addf %3, %6 : vector<80x32xf32>
    %c0_6 = arith.constant 0 : index
    %c0_7 = arith.constant 0 : index
    %8 = vector.load %arg9[%c0_6, %c0_7] : memref<80x32xf32, #tpu.memory_space<vmem>>, vector<80x32xf32>
    tpu.vector_store %arg9[%c0_6, %c0_7], %7 {strides = array<i32>} : memref<80x32xf32, #tpu.memory_space<vmem>>, vector<80x32xf32>,
    %c0_i32_8 = arith.constant 0 : i32
    %9 = arith.cmpi eq, %arg2, %c0_i32_8 : i32
    %10 = arith.extui %9 : i1 to i32
    %c0_i32_9 = arith.constant 0 : i32
    %11 = arith.cmpi ne, %10, %c0_i32_9 : i32
    scf.if %11 {
      %c0_10 = arith.constant 0 : index
      %c0_11 = arith.constant 0 : index
      %12 = vector.load %arg5[%c0_10, %c0_11] : memref<1x32xf32, #tpu.memory_space<vmem>>, vector<1x32xf32>
      %c0_12 = arith.constant 0 : index
      %c0_13 = arith.constant 0 : index
      %13 = vector.load %arg9[%c0_12, %c0_13] : memref<80x32xf32, #tpu.memory_space<vmem>>, vector<80x32xf32>
      %14 = vector.broadcast %12 : vector<1x32xf32> to vector<80x32xf32>
      %15 = arith.addf %13, %14 : vector<80x32xf32>
      %16 = arith.truncf %15 : vector<80x32xf32> to vector<80x32xbf16>
      %c0_14 = arith.constant 0 : index
      %c0_15 = arith.constant 0 : index
      %17 = vector.load %arg6[%c0_14, %c0_15] : memref<80x32xbf16, #tpu.memory_space<vmem>>, vector<80x32xbf16>
      tpu.vector_store %arg6[%c0_14, %c0_15], %16 {strides = array<i32>} : memref<80x32xbf16, #tpu.memory_space<vmem>>, vector<80x32xbf16>,
      %c0_16 = arith.constant 0 : index
      %c0_17 = arith.constant 0 : index
      %18 = vector.load %arg9[%c0_16, %c0_17] : memref<80x32xf32, #tpu.memory_space<vmem>>, vector<80x32xf32>
      %cst_18 = arith.constant dense<0.000000e+00> : vector<32xf32>
      %19 = vector.multi_reduction <add>, %18, %cst_18 [0] : vector<80x32xf32> to vector<32xf32>
      %20 = vector.shape_cast %19 : vector<32xf32> to vector<1x32xf32>
      %21 = arith.mulf %18, %18 : vector<80x32xf32>
      %cst_19 = arith.constant dense<0.000000e+00> : vector<32xf32>
      %22 = vector.multi_reduction <add>, %21, %cst_19 [0] : vector<80x32xf32> to vector<32xf32>
      %23 = vector.shape_cast %22 : vector<32xf32> to vector<1x32xf32>
      %cst_20 = arith.constant 8.000000e+01 : f32
      %24 = vector.broadcast %cst_20 : f32 to vector<1x32xf32>
      %25 = arith.mulf %24, %12 : vector<1x32xf32>
      %26 = arith.addf %20, %25 : vector<1x32xf32>
      %27 = vector.shape_cast %26 : vector<1x32xf32> to vector<1x32xf32>
      %28 = vector.broadcast %27 : vector<1x32xf32> to vector<8x32xf32>
      %c0_21 = arith.constant 0 : index
      %c0_22 = arith.constant 0 : index
      %29 = vector.load %arg7[%c0_21, %c0_22] : memref<8x32xf32, #tpu.memory_space<vmem>>, vector<8x32xf32>
      tpu.vector_store %arg7[%c0_21, %c0_22], %28 {strides = array<i32>} : memref<8x32xf32, #tpu.memory_space<vmem>>, vector<8x32xf32>,
      %cst_23 = arith.constant 2.000000e+00 : f32
      %30 = vector.broadcast %cst_23 : f32 to vector<1x32xf32>
      %31 = arith.mulf %30, %12 : vector<1x32xf32>
      %32 = arith.mulf %31, %20 : vector<1x32xf32>
      %33 = arith.addf %23, %32 : vector<1x32xf32>
      %cst_24 = arith.constant 8.000000e+01 : f32
      %34 = vector.broadcast %cst_24 : f32 to vector<1x32xf32>
      %35 = arith.mulf %34, %12 : vector<1x32xf32>
      %36 = arith.mulf %35, %12 : vector<1x32xf32>
      %37 = arith.addf %33, %36 : vector<1x32xf32>
      %38 = vector.shape_cast %37 : vector<1x32xf32> to vector<1x32xf32>
      %39 = vector.broadcast %38 : vector<1x32xf32> to vector<8x32xf32>
      %c0_25 = arith.constant 0 : index
      %c0_26 = arith.constant 0 : index
      %40 = vector.load %arg8[%c0_25, %c0_26] : memref<8x32xf32, #tpu.memory_space<vmem>>, vector<8x32xf32>
      tpu.vector_store %arg8[%c0_25, %c0_26], %39 {strides = array<i32>} : memref<8x32xf32, #tpu.memory_space<vmem>>, vector<8x32xf32>,
    } else {
    }
    return
  }
  func.func @transform_0(%arg0: i32, %arg1: i32, %arg2: i32) -> (i32, i32) {
    %c0_i32 = arith.constant 0 : i32
    return %arg0, %arg2 : i32, i32
  }
  func.func @transform_1(%arg0: i32, %arg1: i32, %arg2: i32) -> (i32, i32) {
    %c0_i32 = arith.constant 0 : i32
    return %arg2, %arg1 : i32, i32
  }
  func.func @transform_2(%arg0: i32, %arg1: i32, %arg2: i32) -> (i32, i32) {
    %c0_i32 = arith.constant 0 : i32
    %c0_i32_0 = arith.constant 0 : i32
    return %c0_i32, %arg1 : i32, i32
  }
  func.func @transform_3(%arg0: i32, %arg1: i32, %arg2: i32) -> (i32, i32) {
    %c0_i32 = arith.constant 0 : i32
    return %arg0, %arg1 : i32, i32
  }
  func.func @transform_4(%arg0: i32, %arg1: i32, %arg2: i32) -> (i32, i32) {
    %c0_i32 = arith.constant 0 : i32
    return %arg0, %arg1 : i32, i32
  }
  func.func @transform_5(%arg0: i32, %arg1: i32, %arg2: i32) -> (i32, i32) {
    %c0_i32 = arith.constant 0 : i32
    return %arg0, %arg1 : i32, i32
  }
}

</mosaic_0001>

<llo_original>
// kernel: tile.9
$region0: #{tile.9}
  #allocation0 [shape = 's32[1]{0}', space=sflag, size = 0x4, scoped, tag = 'scoped memory for tile.9']
  %s0 = inlined_call_operand.vmem [shape: f32[8], index: 0, kind: input, shape index: {}]
  %s1 = inlined_call_operand.vmem [shape: f32[4,8], index: 1, kind: output, shape index: {}]
  // Predicated region
  $region2: #{tile.9} parent=0 // pred_check
    _
  $region3: #{tile.9} parent=0 // pred_check_branch
    %3 = sbr.rel (0) target = $region5
  $region4: #{tile.9} parent=0 // pred_region
    _
  $region5: #{tile.9} parent=0 // pred_fallthru
    _
  %v4 = vld [vmem:[%s0] ss:$0 sm:$0xff]
  %5 = vst [vmem:[%s1] sm:$0xf] %v4

// kernel: tile.11
$region0: #{tile.11}
  %s0 = inlined_call_operand.vmem [shape: f32[4,8], index: 0, kind: input, shape index: {}]
  %s1 = inlined_call_operand.vmem [shape: f32[1,32], index: 1, kind: output, shape index: {}]
  $region1: #{tile.11} parent=0
    #allocation0 [shape = 'u8[4096]{0}', space=vmem, size = 0x1000, scoped, tag = 'scoped mem for output reshape']
    #allocation1 [shape = 'u8[4096]{0}', space=vmem, size = 0x1000, scoped, tag = 'scoped mem for input reshape']
    %s3 = ssub.s32 16, 1
    %v4 = vld [vmem:[%s0] sm:%s3]
    %5 = vst [vmem:[#allocation1] sm:%s3] %v4
    %v6 = vld [vmem:[#allocation1] sm:$0x1]
    %vm7 = vcmask 64512
    %8 = vst.msk [vmem:[#allocation0] sm:$0x1] %vm7, %v6
    %s9 = scalar_lea.vmem [#allocation1], 3
    %v10 = vld [vmem:[%s9] sm:$0x1]
    %11 = vrot.lane.b32.xlu0 %v10, 24
    %v12 = vpop.permute.xlu0 %11
    %vm13 = vcmask 261312
    %14 = vst.msk [vmem:[#allocation0] sm:$0x1] %vm13, %v12
    %s15 = scalar_lea.vmem [#allocation1], 2
    %v16 = vld [vmem:[%s15] sm:$0x1]
    %17 = vrot.lane.b32.xlu0 %v16, 16
    %v18 = vpop.permute.xlu0 %17
    %vm19 = vcmask 195712
    %20 = vst.msk [vmem:[#allocation0] sm:$0x1] %vm19, %v18
    %s21 = scalar_lea.vmem [#allocation1], 1
    %v22 = vld [vmem:[%s21] sm:$0x1]
    %23 = vrot.lane.b32.xlu0 %v22, 8
    %v24 = vpop.permute.xlu0 %23
    %vm25 = vcmask 130112
    %26 = vst.msk [vmem:[#allocation0] sm:$0x1] %vm25, %v24
    %s28 = ssub.s32 2, 1
    %v29 = vld [vmem:[#allocation0] sm:%s28]
    %s31 = ssub.s32 2, 1
    %32 = vst [vmem:[%s1] sm:%s31] %v29

// kernel: _lambda_.1
$region0: #{_lambda_.1}
  #allocation0 [shape = 'u32[]', space=smem, size = 0x4, offset = 0x4, fixed_abs, tag = 'smem constant byte address 0x4 - core index']
  #allocation1 [shape = 'u32[72,128]{1,0:T(1,128)}', space=vmem, size = 0x9000, scoped, tag = 'internal scratch']
  #allocation2 [shape = 'f32[80,32]{1,0:T(8,128)}', space=vmem, size = 0xa000, scoped, tag = 'scratch operand']
  %s0 = inlined_call_operand.vmem [shape: bf16[80,64], index: 0, kind: input, shape index: {}]
  %s1 = inlined_call_operand.vmem [shape: bf16[64,32], index: 1, kind: input, shape index: {}]
  %s2 = inlined_call_operand.vmem [shape: f32[1,32], index: 2, kind: input, shape index: {}]
  %s3 = inlined_call_operand.vmem [shape: bf16[80,32], index: 3, kind: output, shape index: {0}]
  %s4 = inlined_call_operand.vmem [shape: f32[8,32], index: 4, kind: output, shape index: {1}]
  %s5 = inlined_call_operand.vmem [shape: f32[8,32], index: 5, kind: output, shape index: {2}]
  %6 = xla_tuple %s3, %s4, %s5
  %s7 = sld [smem:[#allocation0]]
  $region46: #{_lambda_.1} parent=0
    _
  %s9 = ssub.s32 1, %s7
  %s10 = scalar_select 0, %s9, %s7
  // Predicated region
  $region2: #{_lambda_.1} parent=0 // pred_check
    _
  $region3: #{_lambda_.1} parent=0 // pred_check_branch
    %12 = sbr.rel (0) target = $region5
  $region4: #{_lambda_.1} parent=0 // pred_region
    _
  $region5: #{_lambda_.1} parent=0 // pred_fallthru
    _
  // Predicated region
  $region6: #{_lambda_.1} parent=0 // pred_check
    _
  $region7: #{_lambda_.1} parent=0 // pred_check_branch
    %14 = sbr.rel (0) target = $region9
  $region8: #{_lambda_.1} parent=0 // pred_region
    _
  $region9: #{_lambda_.1} parent=0 // pred_fallthru
    _
  // Predicated region
  $region10: #{_lambda_.1} parent=0 // pred_check
    _
  $region11: #{_lambda_.1} parent=0 // pred_check_branch
    %16 = sbr.rel (0) target = $region13
  $region12: #{_lambda_.1} parent=0 // pred_region
    _
  $region13: #{_lambda_.1} parent=0 // pred_fallthru
    _
  %p18 = scmp.eq.s32.totalorder 0, 0
  // Predicated region
  $region14: #{_lambda_.1} parent=0 // pred_check
    %p19 = pneg %p18
  $region15: #{_lambda_.1} parent=0 // pred_check_branch
    %21 = sbr.rel (%p19) target = $region17
  $region16: #{_lambda_.1} parent=0 // pred_region
    %vm22 = vcmask 261120
    %23 = vst.msk [vmem:[#allocation2] sm:$0xff] %vm22, 0.0
    %24 = vst.msk [vmem:[#allocation2 + $0x8] sm:$0xff] %vm22, 0.0
    %25 = vst.msk [vmem:[#allocation2 + $0x10] sm:$0xff] %vm22, 0.0
    %26 = vst.msk [vmem:[#allocation2 + $0x18] sm:$0xff] %vm22, 0.0
    %27 = vst.msk [vmem:[#allocation2 + $0x20] sm:$0xff] %vm22, 0.0
    %28 = vst.msk [vmem:[#allocation2 + $0x28] sm:$0xff] %vm22, 0.0
    %29 = vst.msk [vmem:[#allocation2 + $0x30] sm:$0xff] %vm22, 0.0
    %30 = vst.msk [vmem:[#allocation2 + $0x38] sm:$0xff] %vm22, 0.0
    %31 = vst.msk [vmem:[#allocation2 + $0x40] sm:$0xff] %vm22, 0.0
    %32 = vst.msk [vmem:[#allocation2 + $0x48] sm:$0xff] %vm22, 0.0
  $region17: #{_lambda_.1} parent=0 // pred_fallthru
    _
  %v33 = vld [vmem:[#allocation2] sm:$0xff]
  %v34 = vld [vmem:[#allocation2 + $0x8] sm:$0xff]
  %v35 = vld [vmem:[#allocation2 + $0x10] sm:$0xff]
  %v36 = vld [vmem:[#allocation2 + $0x18] sm:$0xff]
  %v37 = vld [vmem:[#allocation2 + $0x20] sm:$0xff]
  %v38 = vld [vmem:[#allocation2 + $0x28] sm:$0xff]
  %v39 = vld [vmem:[#allocation2 + $0x30] sm:$0xff]
  %v40 = vld [vmem:[#allocation2 + $0x38] sm:$0xff]
  %v41 = vld [vmem:[#allocation2 + $0x40] sm:$0xff]
  %v42 = vld [vmem:[#allocation2 + $0x48] sm:$0xff]
  %v43 = vld [vmem:[%s0] sm:$0xf]
  %v44 = vld [vmem:[%s0 + $0x4] sm:$0xf]
  %v45 = vld [vmem:[%s0 + $0x8] sm:$0xf]
  %v46 = vld [vmem:[%s0 + $0xc] sm:$0xf]
  %v47 = vld [vmem:[%s0 + $0x10] sm:$0xf]
  %v48 = vld [vmem:[%s0 + $0x14] sm:$0xf]
  %v49 = vld [vmem:[%s0 + $0x18] sm:$0xf]
  %v50 = vld [vmem:[%s0 + $0x1c] sm:$0xf]
  %v51 = vld [vmem:[%s0 + $0x20] sm:$0xf]
  %v52 = vld [vmem:[%s0 + $0x24] sm:$0xf]
  %v53 = vld [vmem:[%s1] sm:$0xf]
  %v54 = vld [vmem:[%s1 + $0x4] sm:$0xf]
  %v55 = vld [vmem:[%s1 + $0x8] sm:$0xf]
  %v56 = vld [vmem:[%s1 + $0xc] sm:$0xf]
  %v57 = vld [vmem:[%s1 + $0x10] sm:$0xf]
  %v58 = vld [vmem:[%s1 + $0x14] sm:$0xf]
  %v59 = vld [vmem:[%s1 + $0x18] sm:$0xf]
  %v60 = vld [vmem:[%s1 + $0x1c] sm:$0xf]
  %v71 = vunpack.c.l.b16 %v43
  %v72 = vunpack.c.l.b16 %v44
  %v73 = vunpack.c.l.b16 %v45
  %v74 = vunpack.c.l.b16 %v46
  %v75 = vunpack.c.l.b16 %v47
  %v76 = vunpack.c.l.b16 %v48
  %v77 = vunpack.c.l.b16 %v49
  %v78 = vunpack.c.l.b16 %v50
  %v79 = vunpack.c.l.b16 %v51
  %v80 = vunpack.c.l.b16 %v52
  %v81 = vpack.c.b16 %v72, %v71
  %v82 = vpack.c.b16 %v74, %v73
  %v83 = vpack.c.b16 %v76, %v75
  %v84 = vpack.c.b16 %v78, %v77
  %v85 = vpack.c.b16 %v80, %v79
  %v94 = vunpack.c.l.b16 %v53
  %v95 = vunpack.c.l.b16 %v54
  %v96 = vunpack.c.l.b16 %v55
  %v97 = vunpack.c.l.b16 %v56
  %v98 = vunpack.c.l.b16 %v57
  %v99 = vunpack.c.l.b16 %v58
  %v100 = vunpack.c.l.b16 %v59
  %v101 = vunpack.c.l.b16 %v60
  %v102 = vpack.c.b16 %v95, %v94
  %v103 = vpack.c.b16 %v97, %v96
  %v104 = vpack.c.b16 %v99, %v98
  %v105 = vpack.c.b16 %v101, %v100
  %vm110 = vcmask 523264
  %v112 = vsel %vm110, %v81, 0
  %v115 = vsel %vm110, %v82, 0
  %v118 = vsel %vm110, %v83, 0
  %v121 = vsel %vm110, %v84, 0
  %v124 = vsel %vm110, %v85, 0
  %126 = vmatpush.bf16.msra.mxu0 0
  %127 = vmatpush.bf16.msra.mxu0 0
  %128 = vmatpush.bf16.msra.mxu0 0
  %129 = vmatpush.bf16.msra.mxu0 0
  %130 = vmatpush.bf16.msra.mxu0 %v105
  %131 = vmatpush.bf16.msra.mxu0 %v104
  %132 = vmatpush.bf16.msra.mxu0 %v103
  %133 = vmatpush.bf16.msra.mxu0 %v102
  %134 = vmatmul.bf16.gmra.mxu0 %v112
  %v135 = vpop.f32.mrf.mxu0
  %v136 = vadd.f32 0.0, %v135
  %v137 = vpop.f32.mrf.mxu0
  %v138 = vadd.f32 0.0, %v137
  %139 = vmatmul.bf16.gmra.mxu0 %v115
  %v140 = vpop.f32.mrf.mxu0
  %v141 = vadd.f32 0.0, %v140
  %v142 = vpop.f32.mrf.mxu0
  %v143 = vadd.f32 0.0, %v142
  %144 = vmatmul.bf16.gmra.mxu0 %v118
  %v145 = vpop.f32.mrf.mxu0
  %v146 = vadd.f32 0.0, %v145
  %v147 = vpop.f32.mrf.mxu0
  %v148 = vadd.f32 0.0, %v147
  %149 = vmatmul.bf16.gmra.mxu0 %v121
  %v150 = vpop.f32.mrf.mxu0
  %v151 = vadd.f32 0.0, %v150
  %v152 = vpop.f32.mrf.mxu0
  %v153 = vadd.f32 0.0, %v152
  %154 = vmatmul.bf16.gmra.mxu0 %v124
  %v155 = vpop.f32.mrf.mxu0
  %v156 = vadd.f32 0.0, %v155
  %v157 = vpop.f32.mrf.mxu0
  %v158 = vadd.f32 0.0, %v157
  %159 = vdwg.mxu0
  %v160 = vadd.f32 %v33, %v136
  %v161 = vadd.f32 %v34, %v138
  %v162 = vadd.f32 %v35, %v141
  %v163 = vadd.f32 %v36, %v143
  %v164 = vadd.f32 %v37, %v146
  %v165 = vadd.f32 %v38, %v148
  %v166 = vadd.f32 %v39, %v151
  %v167 = vadd.f32 %v40, %v153
  %v168 = vadd.f32 %v41, %v156
  %v169 = vadd.f32 %v42, %v158
  %vm170 = vcmask 261120
  %171 = vst.msk [vmem:[#allocation2] sm:$0xff] %vm170, %v160
  %172 = vst.msk [vmem:[#allocation2 + $0x8] sm:$0xff] %vm170, %v161
  %173 = vst.msk [vmem:[#allocation2 + $0x10] sm:$0xff] %vm170, %v162
  %174 = vst.msk [vmem:[#allocation2 + $0x18] sm:$0xff] %vm170, %v163
  %175 = vst.msk [vmem:[#allocation2 + $0x20] sm:$0xff] %vm170, %v164
  %176 = vst.msk [vmem:[#allocation2 + $0x28] sm:$0xff] %vm170, %v165
  %177 = vst.msk [vmem:[#allocation2 + $0x30] sm:$0xff] %vm170, %v166
  %178 = vst.msk [vmem:[#allocation2 + $0x38] sm:$0xff] %vm170, %v167
  %179 = vst.msk [vmem:[#allocation2 + $0x40] sm:$0xff] %vm170, %v168
  %180 = vst.msk [vmem:[#allocation2 + $0x48] sm:$0xff] %vm170, %v169
  // Predicated region
  $region18: #{_lambda_.1} parent=0 // pred_check
    %p181 = pneg %p18
  $region19: #{_lambda_.1} parent=0 // pred_check_branch
    %183 = sbr.rel (%p181) target = $region21
  $region20: #{_lambda_.1} parent=0 // pred_region
    %v184 = vld [vmem:[%s2] sm:$0x1]
    %v185 = vld [vmem:[#allocation2] sm:$0xff]
    %v186 = vld [vmem:[#allocation2 + $0x8] sm:$0xff]
    %v187 = vld [vmem:[#allocation2 + $0x10] sm:$0xff]
    %v188 = vld [vmem:[#allocation2 + $0x18] sm:$0xff]
    %v189 = vld [vmem:[#allocation2 + $0x20] sm:$0xff]
    %v190 = vld [vmem:[#allocation2 + $0x28] sm:$0xff]
    %v191 = vld [vmem:[#allocation2 + $0x30] sm:$0xff]
    %v192 = vld [vmem:[#allocation2 + $0x38] sm:$0xff]
    %v193 = vld [vmem:[#allocation2 + $0x40] sm:$0xff]
    %v194 = vld [vmem:[#allocation2 + $0x48] sm:$0xff]
    %v196 = vperm.slane %v184, 0
    %v198 = vadd.f32 %v185, %v196
    %v199 = vadd.f32 %v186, %v196
    %v200 = vadd.f32 %v187, %v196
    %v201 = vadd.f32 %v188, %v196
    %v202 = vadd.f32 %v189, %v196
    %v203 = vadd.f32 %v190, %v196
    %v204 = vadd.f32 %v191, %v196
    %v205 = vadd.f32 %v192, %v196
    %v206 = vadd.f32 %v193, %v196
    %v207 = vadd.f32 %v194, %v196
    %v208 = vpack.c.bf16 %v198, %v198
    %v209 = vpack.c.bf16 %v199, %v199
    %v210 = vpack.c.bf16 %v200, %v200
    %v211 = vpack.c.bf16 %v201, %v201
    %v212 = vpack.c.bf16 %v202, %v202
    %v213 = vpack.c.bf16 %v203, %v203
    %v214 = vpack.c.bf16 %v204, %v204
    %v215 = vpack.c.bf16 %v205, %v205
    %v216 = vpack.c.bf16 %v206, %v206
    %v217 = vpack.c.bf16 %v207, %v207
    %vm218 = vcmask 257024
    %219 = vst.msk [vmem:[%s3] sm:$0xf] %vm218, %v208
    %220 = vst.msk [vmem:[%s3 + $0x4] sm:$0xf] %vm218, %v209
    %221 = vst.msk [vmem:[%s3 + $0x8] sm:$0xf] %vm218, %v210
    %222 = vst.msk [vmem:[%s3 + $0xc] sm:$0xf] %vm218, %v211
    %223 = vst.msk [vmem:[%s3 + $0x10] sm:$0xf] %vm218, %v212
    %224 = vst.msk [vmem:[%s3 + $0x14] sm:$0xf] %vm218, %v213
    %225 = vst.msk [vmem:[%s3 + $0x18] sm:$0xf] %vm218, %v214
    %226 = vst.msk [vmem:[%s3 + $0x1c] sm:$0xf] %vm218, %v215
    %227 = vst.msk [vmem:[%s3 + $0x20] sm:$0xf] %vm218, %v216
    %228 = vst.msk [vmem:[%s3 + $0x24] sm:$0xf] %vm218, %v217
    %v229 = vld [vmem:[#allocation2] sm:$0xff]
    %v230 = vld [vmem:[#allocation2 + $0x8] sm:$0xff]
    %v231 = vld [vmem:[#allocation2 + $0x10] sm:$0xff]
    %v232 = vld [vmem:[#allocation2 + $0x18] sm:$0xff]
    %v233 = vld [vmem:[#allocation2 + $0x20] sm:$0xff]
    %v234 = vld [vmem:[#allocation2 + $0x28] sm:$0xff]
    %v235 = vld [vmem:[#allocation2 + $0x30] sm:$0xff]
    %v236 = vld [vmem:[#allocation2 + $0x38] sm:$0xff]
    %v237 = vld [vmem:[#allocation2 + $0x40] sm:$0xff]
    %v238 = vld [vmem:[#allocation2 + $0x48] sm:$0xff]
    %v239 = vsel %vm170, %v229, 0.0
    %v240 = vsel %vm170, %v230, 0.0
    %v241 = vadd.f32 %v239, %v240
    %v242 = vsel %vm170, %v231, 0.0
    %v243 = vadd.f32 %v241, %v242
    %v244 = vsel %vm170, %v232, 0.0
    %v245 = vadd.f32 %v243, %v244
    %v246 = vsel %vm170, %v233, 0.0
    %v247 = vadd.f32 %v245, %v246
    %v248 = vsel %vm170, %v234, 0.0
    %v249 = vadd.f32 %v247, %v248
    %v250 = vsel %vm170, %v235, 0.0
    %v251 = vadd.f32 %v249, %v250
    %v252 = vsel %vm170, %v236, 0.0
    %v253 = vadd.f32 %v251, %v252
    %v254 = vsel %vm170, %v237, 0.0
    %v255 = vadd.f32 %v253, %v254
    %v256 = vsel %vm170, %v238, 0.0
    %v257 = vadd.f32 %v255, %v256
    %v258 = vrot.slane %v257, 4
    %v259 = vadd.f32 %v257, %v258
    %v260 = vrot.slane %v259, 2
    %v261 = vadd.f32 %v259, %v260
    %v262 = vrot.slane %v261, 1
    %v263 = vadd.f32 %v261, %v262
    %v264 = vmul.f32 %v229, %v229
    %v265 = vmul.f32 %v230, %v230
    %v266 = vmul.f32 %v231, %v231
    %v267 = vmul.f32 %v232, %v232
    %v268 = vmul.f32 %v233, %v233
    %v269 = vmul.f32 %v234, %v234
    %v270 = vmul.f32 %v235, %v235
    %v271 = vmul.f32 %v236, %v236
    %v272 = vmul.f32 %v237, %v237
    %v273 = vmul.f32 %v238, %v238
    %v274 = vsel %vm170, %v264, 0.0
    %v275 = vsel %vm170, %v265, 0.0
    %v276 = vadd.f32 %v274, %v275
    %v277 = vsel %vm170, %v266, 0.0
    %v278 = vadd.f32 %v276, %v277
    %v279 = vsel %vm170, %v267, 0.0
    %v280 = vadd.f32 %v278, %v279
    %v281 = vsel %vm170, %v268, 0.0
    %v282 = vadd.f32 %v280, %v281
    %v283 = vsel %vm170, %v269, 0.0
    %v284 = vadd.f32 %v282, %v283
    %v285 = vsel %vm170, %v270, 0.0
    %v286 = vadd.f32 %v284, %v285
    %v287 = vsel %vm170, %v271, 0.0
    %v288 = vadd.f32 %v286, %v287
    %v289 = vsel %vm170, %v272, 0.0
    %v290 = vadd.f32 %v288, %v289
    %v291 = vsel %vm170, %v273, 0.0
    %v292 = vadd.f32 %v290, %v291
    %v293 = vrot.slane %v292, 4
    %v294 = vadd.f32 %v292, %v293
    %v295 = vrot.slane %v294, 2
    %v296 = vadd.f32 %v294, %v295
    %v297 = vrot.slane %v296, 1
    %v298 = vadd.f32 %v296, %v297
    %v299 = vmul.f32 %v184, 80.0
    %v300 = vadd.f32 %v263, %v299
    %v301 = vperm.slane %v300, 0
    %302 = vst.msk [vmem:[%s4] sm:$0xff] %vm170, %v301
    %v303 = vmul.f32 %v184, 2.0
    %v304 = vmul.f32 %v303, %v263
    %v305 = vadd.f32 %v298, %v304
    %v306 = vmul.f32 %v299, %v184
    %v307 = vadd.f32 %v305, %v306
    %v308 = vperm.slane %v307, 0
    %309 = vst.msk [vmem:[%s5] sm:$0xff] %vm170, %v308
  $region21: #{_lambda_.1} parent=0 // pred_fallthru
    _
  // Predicated region
  $region22: #{_lambda_.1} parent=0 // pred_check
    _
  $region23: #{_lambda_.1} parent=0 // pred_check_branch
    %311 = sbr.rel (0) target = $region25
  $region24: #{_lambda_.1} parent=0 // pred_region
    _
  $region25: #{_lambda_.1} parent=0 // pred_fallthru
    _
  // Predicated region
  $region26: #{_lambda_.1} parent=0 // pred_check
    _
  $region27: #{_lambda_.1} parent=0 // pred_check_branch
    %313 = sbr.rel (0) target = $region29
  $region28: #{_lambda_.1} parent=0 // pred_region
    _
  $region29: #{_lambda_.1} parent=0 // pred_fallthru
    _
  // Predicated region
  $region30: #{_lambda_.1} parent=0 // pred_check
    _
  $region31: #{_lambda_.1} parent=0 // pred_check_branch
    %315 = sbr.rel (0) target = $region33
  $region32: #{_lambda_.1} parent=0 // pred_region
    _
  $region33: #{_lambda_.1} parent=0 // pred_fallthru
    _
  // Predicated region
  $region34: #{_lambda_.1} parent=0 // pred_check
    _
  $region35: #{_lambda_.1} parent=0 // pred_check_branch
    %317 = sbr.rel (0) target = $region37
  $region36: #{_lambda_.1} parent=0 // pred_region
    _
  $region37: #{_lambda_.1} parent=0 // pred_fallthru
    _
  // Predicated region
  $region38: #{_lambda_.1} parent=0 // pred_check
    _
  $region39: #{_lambda_.1} parent=0 // pred_check_branch
    %319 = sbr.rel (0) target = $region41
  $region40: #{_lambda_.1} parent=0 // pred_region
    _
  $region41: #{_lambda_.1} parent=0 // pred_fallthru
    _
  // Predicated region
  $region42: #{_lambda_.1} parent=0 // pred_check
    _
  $region43: #{_lambda_.1} parent=0 // pred_check_branch
    %321 = sbr.rel (0) target = $region45
  $region44: #{_lambda_.1} parent=0 // pred_region
    _
  $region45: #{_lambda_.1} parent=0 // pred_fallthru
    _

</llo_original>
